<compile_context>
chip_gen: v7x
topology: tpu7x:2x2x1
jax: 0.10.0
libtpu: 0.0.40
codegen_flags: <defaults>
</compile_context>

<pallas_src>
import functools
import numpy as np
import jax
import jax.numpy as jnp
from jax.experimental import pallas as pl
from jax.experimental.pallas import tpu as pltpu


def _round_up(x: int, m: int) -> int:
    return ((x + m - 1) // m) * m


def _layer_norm(x, g, b, eps=1e-5):
    mu = jnp.mean(x, axis=-1, keepdims=True)
    var = jnp.mean(jnp.square(x - mu), axis=-1, keepdims=True)
    return (x - mu) * jax.lax.rsqrt(var + eps) * g + b


# ----------------------------------------------------------------------------
# Pallas kernel 1: fused branch projection  out = x @ W_all
#   Small-shape friendly: M padded to a multiple of 8 only; K and N are single
#   full-extent blocks (legal regardless of (8,128) divisibility), so no 4x
#   K/N padding amplification. M is split over >=2 grid steps when possible so
#   the second TensorCore on v7x participates.
# ----------------------------------------------------------------------------
def _matmul_kernel(x_ref, w_ref, o_ref):
    o_ref[...] = jnp.dot(x_ref[...], w_ref[...],
                         preferred_element_type=jnp.float32).astype(o_ref.dtype)


def pallas_matmul(x, w):
    """x: (M, K), w: (K, N) -> (M, N). Intended for modest K, N (single block)."""
    M, K = x.shape
    Kw, N = w.shape
    assert K == Kw
    Mp = _round_up(M, 8)
    xp = x if Mp == M else jnp.pad(x, ((0, Mp - M), (0, 0)))

    tm = Mp
    if Mp >= 16 and (Mp // 2) % 8 == 0:
        tm = Mp // 2                       # >=2 parallel grid steps (v7x 2 TCs)

    out = pl.pallas_call(
        _matmul_kernel,
        out_shape=jax.ShapeDtypeStruct((Mp, N), x.dtype),
        grid=(Mp // tm,),
        in_specs=[pl.BlockSpec((tm, K), lambda i: (i, 0)),
                  pl.BlockSpec((K, N), lambda i: (0, 0))],
        out_specs=pl.BlockSpec((tm, N), lambda i: (i, 0)),
        compiler_params=pltpu.CompilerParams(
            dimension_semantics=("parallel",)),
        cost_estimate=pl.CostEstimate(
            flops=2 * M * K * N, transcendentals=0,
            bytes_accessed=(M * K + K * N + M * N) * x.dtype.itemsize),
    )(xp, w)
    return out if Mp == M else out[:M]


# ----------------------------------------------------------------------------
# Pallas kernel 2: fused MAB (Set-Transformer block)
#   One grid step = one batch element; everything (QKV projection, multi-head
#   attention with stable softmax, residual, LN0, rFF, LN1) stays in VMEM.
#   Heads are handled with lane masks (no lane slicing / concat / reshape).
#   Params are pre-packed at init: W (4, D, D) = [Wq,Wk,Wv,Wo], b (4, D), ln (4, D).
# ----------------------------------------------------------------------------
def _mab_kernel(q_ref, k_ref, w_ref, b_ref, ln_ref, o_ref, *, num_heads):
    _, nq, D = q_ref.shape
    _, nk, _ = k_ref.shape
    ds = D // num_heads
    scale = 1.0 / float(np.sqrt(D))

    q = q_ref[0].astype(jnp.float32)                 # (nq, D)
    k = k_ref[0].astype(jnp.float32)                 # (nk, D)
    wq = w_ref[0].astype(jnp.float32)                # (D, D)
    wk = w_ref[1].astype(jnp.float32)
    wv = w_ref[2].astype(jnp.float32)
    wo = w_ref[3].astype(jnp.float32)
    b = b_ref[...].astype(jnp.float32)               # (4, D)
    ln = ln_ref[...].astype(jnp.float32)             # (4, D)

    qp = jnp.dot(q, wq, preferred_element_type=jnp.float32) + b[0:1, :]
    kp = jnp.dot(k, wk, preferred_element_type=jnp.float32) + b[1:2, :]
    vp = jnp.dot(k, wv, preferred_element_type=jnp.float32) + b[2:3, :]

    # Per-head attention via lane masks: masking qp zeroes non-head lanes in the
    # contraction, and att @ (vp * mask) lands the result in that head's lanes,
    # so summing over heads reproduces the concatenated multi-head output.
    head_id = jax.lax.broadcasted_iota(jnp.int32, (1, D), 1) // ds
    attn_out = jnp.zeros((nq, D), jnp.float32)
    for h in range(num_heads):
        m = (head_id == h).astype(jnp.float32)                       # (1, D)
        logits = jax.lax.dot_general(
            qp * m, kp, (((1,), (1,)), ((), ())),
            preferred_element_type=jnp.float32) * scale              # (nq, nk)
        logits = logits - jnp.max(logits, axis=-1, keepdims=True)
        e = jnp.exp(logits)
        att = e / jnp.sum(e, axis=-1, keepdims=True)
        attn_out = attn_out + jnp.dot(att, vp * m,
                                      preferred_element_type=jnp.float32)

    o = qp + attn_out                                                # residual
    o = _layer_norm(o, ln[0:1, :], ln[1:2, :])                       # LN0
    ff = jnp.dot(o, wo, preferred_element_type=jnp.float32) + b[3:4, :]
    o = o + jnp.maximum(ff, 0.0)                                     # rFF residual
    o = _layer_norm(o, ln[2:3, :], ln[3:4, :])                       # LN1
    o_ref[0] = o.astype(o_ref.dtype)


def pallas_mab(Q, K, W, b, ln, *, num_heads):
    """Q: (Bq, nq, D) with Bq in {1, Bx} (Bq=1 -> shared seeds/inducing points),
       K: (Bx, nk, D). Returns (Bx, nq, D)."""
    Bq, nq, D = Q.shape
    Bx, nk, Dk = K.shape
    assert D == Dk and W.shape == (4, D, D) and Bq in (1, Bx)
    assert D % num_heads == 0

    q_map = (lambda i: (0, 0, 0)) if Bq == 1 else (lambda i: (i, 0, 0))
    kernel = functools.partial(_mab_kernel, num_heads=num_heads)

    flops = Bx * (2 * D * D * (2 * nq + 2 * nk) + 4 * num_heads * nq * nk * D)
    bytes_accessed = 4 * (Bq * nq * D + Bx * nk * D + 4 * D * D + 8 * D
                          + Bx * nq * D)
    return pl.pallas_call(
        kernel,
        out_shape=jax.ShapeDtypeStruct((Bx, nq, D), K.dtype),
        grid=(Bx,),
        in_specs=[
            pl.BlockSpec((1, nq, D), q_map),
            pl.BlockSpec((1, nk, D), lambda i: (i, 0, 0)),
            pl.BlockSpec((4, D, D), lambda i: (0, 0, 0)),
            pl.BlockSpec((4, D), lambda i: (0, 0)),
            pl.BlockSpec((4, D), lambda i: (0, 0)),
        ],
        out_specs=pl.BlockSpec((1, nq, D), lambda i: (i, 0, 0)),
        compiler_params=pltpu.CompilerParams(
            dimension_semantics=("parallel",)),
        cost_estimate=pl.CostEstimate(
            flops=flops,
            transcendentals=Bx * num_heads * nq * nk,
            bytes_accessed=bytes_accessed),
    )(Q, K, W, b, ln)


# ----------------------------------------------------------------------------
# Pure-JAX MAB reference (same math; used for validation and use_pallas=False)
# ----------------------------------------------------------------------------
def mab_reference(p, Q, K, num_heads):
    W, b, ln = p["W"], p["b"], p["ln"]
    D = W.shape[-1]
    ds = D // num_heads
    Bx, nk, _ = K.shape
    if Q.shape[0] == 1 and Bx > 1:
        Q = jnp.broadcast_to(Q, (Bx,) + Q.shape[1:])
    nq = Q.shape[1]

    qp = jnp.einsum("bnd,de->bne", Q, W[0]) + b[0]
    kp = jnp.einsum("bnd,de->bne", K, W[1]) + b[1]
    vp = jnp.einsum("bnd,de->bne", K, W[2]) + b[2]

    def split_heads(x):
        Bh, n, _ = x.shape
        return x.reshape(Bh, n, num_heads, ds).transpose(0, 2, 1, 3)  # (B,h,n,ds)

    qh, kh, vh = split_heads(qp), split_heads(kp), split_heads(vp)
    att = jax.nn.softmax(
        jnp.einsum("bhqd,bhkd->bhqk", qh, kh) / float(np.sqrt(D)), axis=-1)
    oh = jnp.einsum("bhqk,bhkd->bhqd", att, vh)
    o = qp + oh.transpose(0, 2, 1, 3).reshape(Bx, nq, D)
    o = _layer_norm(o, ln[0], ln[1])
    o = o + jax.nn.relu(jnp.einsum("bnd,de->bne", o, W[3]) + b[3])
    o = _layer_norm(o, ln[2], ln[3])
    return o


def mab_forward(p, Q, K, num_heads, use_pallas):
    if use_pallas:
        return pallas_mab(Q, K, p["W"], p["b"], p["ln"], num_heads=num_heads)
    return mab_reference(p, Q, K, num_heads)


def isab_forward(p, Xb, num_heads, use_pallas):
    H = mab_forward(p["mab0"], p["I"], Xb, num_heads, use_pallas)   # I shared: Bq=1
    return mab_forward(p["mab1"], Xb, H, num_heads, use_pallas)


def pma_forward(p, Xb, num_heads, use_pallas):
    return mab_forward(p["mab"], p["S"], Xb, num_heads, use_pallas)  # S shared: Bq=1


# ----------------------------------------------------------------------------
# OutfitDisen forward
# ----------------------------------------------------------------------------
def outfit_disen_forward(params, X, *, num_heads, use_pallas=True):
    B, S, D = X.shape
    W_all = params["branch_w_all"]                    # (D, ns*D), pre-fused at init
    ns = W_all.shape[1] // D

    # 1. All branch projections in one matmul (lane-dense N = ns*D, no K padding).
    x2d = X.reshape(B * S, D)
    items = pallas_matmul(x2d, W_all) if use_pallas else x2d @ W_all
    item_f = items.reshape(B, S, ns, D)               # == torch.stack(item_f, dim=2)

    # 2. Diversity loss: F.normalize(p=2, dim=-1), Gram vs identity, squared error.
    #    (B,S,ns,ns) is far below one vreg -> plain JAX.
    norm = jnp.sqrt(jnp.sum(jnp.square(item_f), axis=-1, keepdims=True))
    mat_feats = item_f / jnp.maximum(norm, 1e-12)
    gram = jnp.einsum("bsnd,bsmd->bsnm", mat_feats, mat_feats)
    eye = jnp.eye(ns, dtype=gram.dtype)
    diversity_loss = jnp.sum(jnp.square(eye - gram), axis=(1, 2, 3)).reshape(B, 1)

    # 3. Shared encoder: fold the ns branches into the batch dim (weights shared),
    #    run ISAB -> ISAB -> PMA(1 seed) once on (B*ns, S, D).
    Xb = jnp.transpose(item_f, (0, 2, 1, 3)).reshape(B * ns, S, D)
    h = isab_forward(params["enc0"], Xb, num_heads, use_pallas)
    h = isab_forward(params["enc1"], h, num_heads, use_pallas)
    o = pma_forward(params["pma"], h, num_heads, use_pallas)          # (B*ns, 1, D)
    x = o[:, 0, :].reshape(B, ns, D)                                  # == torch.stack(out_f, dim=1)

    # 4. Pairwise upper-triangle (k=1) feature products. Sub-vreg workload
    #    (B*ns*P*D elements) -> left to XLA per perf feedback.
    item_feat = jnp.transpose(item_f, (0, 2, 1, 3))                   # == torch.stack(item_f, dim=1)
    indx, indy = np.triu_indices(S, k=1)
    if S == 4:
        indx, indy = indx[1:], indy[1:]
    feat_com = item_feat[:, :, indx] * item_feat[:, :, indy]
    return x, feat_com, diversity_loss


# ----------------------------------------------------------------------------
# Deterministic parameter init (weights pre-packed for the fused kernels)
# ----------------------------------------------------------------------------
def _xavier_uniform(key, shape):
    fan_in, fan_out = shape[-2], shape[-1]
    limit = float(np.sqrt(6.0 / (fan_in + fan_out)))
    return jax.random.uniform(key, shape, jnp.float32, -limit, limit)


def init_mab(key, dim_Q, dim_K, dim_V):
    assert dim_Q == dim_K == dim_V, "packed MAB params assume a single shared dim"
    D = dim_V
    ks = jax.random.split(key, 8)
    W = jnp.stack([_xavier_uniform(ks[0], (dim_Q, D)),     # Wq
                   _xavier_uniform(ks[1], (dim_K, D)),     # Wk
                   _xavier_uniform(ks[2], (dim_K, D)),     # Wv
                   _xavier_uniform(ks[3], (D, D))])        # Wo   -> (4, D, D)
    bound = 1.0 / float(np.sqrt(D))
    b = jnp.stack([jax.random.uniform(ks[4 + i], (D,), jnp.float32, -bound, bound)
                   for i in range(4)])                     # (4, D): bq, bk, bv, bo
    ln = jnp.stack([jnp.ones((D,), jnp.float32), jnp.zeros((D,), jnp.float32),
                    jnp.ones((D,), jnp.float32), jnp.zeros((D,), jnp.float32)])
    return dict(W=W, b=b, ln=ln)


def init_isab(key, dim_in, dim_out, num_inds):
    k0, k1, k2 = jax.random.split(key, 3)
    return dict(I=_xavier_uniform(k0, (1, num_inds, dim_out)),
                mab0=init_mab(k1, dim_out, dim_in, dim_out),
                mab1=init_mab(k2, dim_in, dim_out, dim_out))


def init_outfit_disen(key, dim, num_seeds, num_inds, seedvec):
    kb, ke0, ke1, kps, kpm = jax.random.split(key, 5)
    bkeys = jax.random.split(kb, num_seeds)
    W_all = jnp.concatenate(                               # pre-fused branch weights
        [_xavier_uniform(bkeys[i], (dim, dim)) for i in range(num_seeds)], axis=1)
    return dict(
        branch_w_all=W_all,                                # (dim, num_seeds*dim)
        enc0=init_isab(ke0, dim, dim, num_inds),
        enc1=init_isab(ke1, dim, dim, num_inds),
        pma=dict(S=_xavier_uniform(kps, (1, seedvec, dim)),
                 mab=init_mab(kpm, dim, dim, dim)),
    )


if __name__ == "__main__":
    B, S, dim = 2, 8, 32
    num_seeds, num_heads, num_inds, seedvec = 4, 4, 16, 1

    key = jax.random.PRNGKey(0)
    k_params, k_x, k_test = jax.random.split(key, 3)
    params = init_outfit_disen(k_params, dim, num_seeds, num_inds, seedvec)
    X = jax.random.normal(k_x, (B, S, dim), dtype=jnp.float32)

    # --- unit check: fused branch-projection matmul kernel ---
    k1, k2 = jax.random.split(k_test)
    xt = jax.random.normal(k1, (B * S, dim), jnp.float32)
    out_mm = jax.block_until_ready(pallas_matmul(xt, params["branch_w_all"]))
    assert jnp.allclose(out_mm, xt @ params["branch_w_all"], atol=5e-2, rtol=5e-2)

    # --- unit check: fused MAB kernel vs pure-JAX reference ---
    mabp = params["enc0"]["mab0"]
    Qt = jax.random.normal(k1, (B * num_seeds, num_inds, dim), jnp.float32)
    Kt = jax.random.normal(k2, (B * num_seeds, S, dim), jnp.float32)
    out_mab = jax.block_until_ready(
        pallas_mab(Qt, Kt, mabp["W"], mabp["b"], mabp["ln"], num_heads=num_heads))
    ref_mab = mab_reference(mabp, Qt, Kt, num_heads)
    assert out_mab.shape == (B * num_seeds, num_inds, dim)
    assert jnp.allclose(out_mab, ref_mab, atol=5e-2, rtol=5e-2)

    # --- full forward through the Pallas-backed model (6 pallas_calls total) ---
    fwd = jax.jit(functools.partial(outfit_disen_forward,
                                    num_heads=num_heads, use_pallas=True))
    x_out, feat_com, diversity_loss = jax.block_until_ready(fwd(params, X))

    P = S * (S - 1) // 2                     # 28 pairs (S != 4, so none dropped)
    assert x_out.shape == (B, num_seeds, dim)
    assert feat_com.shape == (B, num_seeds, P, dim)
    assert diversity_loss.shape == (B, 1)
    assert bool(jnp.all(jnp.isfinite(x_out)))
    assert bool(jnp.all(jnp.isfinite(feat_com)))
    assert bool(jnp.all(jnp.isfinite(diversity_loss)))

    # --- end-to-end check vs a pure-jnp reference of the same forward ---
    rx, rfc, rdl = outfit_disen_forward(params, X, num_heads=num_heads,
                                        use_pallas=False)
    assert jnp.allclose(x_out, rx, atol=5e-2, rtol=5e-2)
    assert jnp.allclose(feat_com, rfc, atol=5e-2, rtol=5e-2)
    assert jnp.allclose(diversity_loss, rdl, atol=5e-2, rtol=5e-2)

    print("KERNEL_OK")
</pallas_src>

<mosaic_0001>
module attributes {stable_mosaic.version = 11 : i64} {
  func.func @_matmul_kernel(%arg0: i32, %arg1: memref<8x32xf32, #tpu.memory_space<vmem>>, %arg2: memref<32x128xf32, #tpu.memory_space<vmem>>, %arg3: memref<8x128xf32, #tpu.memory_space<vmem>>) attributes {dimension_semantics = [#tpu.dimension_semantics<parallel>], iteration_bounds = array<i64: 2>, scalar_prefetch = 0 : i64, scratch_operands = 0 : i64, tpu.core_type = #tpu.core_type<tc>, window_params = [{transform_indices = @transform_0, window_bounds = array<i64: 8, 32>}, {pipeline_mode = #tpu.pipeline_mode<synchronous>, transform_indices = @transform_1, window_bounds = array<i64: 32, 128>}, {transform_indices = @transform_2, window_bounds = array<i64: 8, 128>}]} {
    %c0 = arith.constant 0 : index
    %c0_0 = arith.constant 0 : index
    %0 = vector.load %arg1[%c0, %c0_0] : memref<8x32xf32, #tpu.memory_space<vmem>>, vector<8x32xf32>
    %c0_1 = arith.constant 0 : index
    %c0_2 = arith.constant 0 : index
    %1 = vector.load %arg2[%c0_1, %c0_2] : memref<32x128xf32, #tpu.memory_space<vmem>>, vector<32x128xf32>
    %cst = arith.constant dense<0.000000e+00> : vector<8x128xf32>
    %2 = tpu.matmul %0, %1, %cst {dimension_numbers = #tpu.dot_dimension_numbers<[1], [0], [0], [1], [0, 0, 1, 1], [], []>} : vector<8x32xf32>, vector<32x128xf32>, vector<8x128xf32> -> vector<8x128xf32>
    %c0_3 = arith.constant 0 : index
    %c0_4 = arith.constant 0 : index
    %3 = vector.load %arg3[%c0_3, %c0_4] : memref<8x128xf32, #tpu.memory_space<vmem>>, vector<8x128xf32>
    tpu.vector_store %arg3[%c0_3, %c0_4], %2 {strides = array<i32>} : memref<8x128xf32, #tpu.memory_space<vmem>>, vector<8x128xf32>,
    return
  }
  func.func @transform_0(%arg0: i32) -> (i32, i32) {
    %c0_i32 = arith.constant 0 : i32
    %c0_i32_0 = arith.constant 0 : i32
    return %arg0, %c0_i32 : i32, i32
  }
  func.func @transform_1(%arg0: i32) -> (i32, i32) {
    %c0_i32 = arith.constant 0 : i32
    %c0_i32_0 = arith.constant 0 : i32
    %c0_i32_1 = arith.constant 0 : i32
    return %c0_i32, %c0_i32_0 : i32, i32
  }
  func.func @transform_2(%arg0: i32) -> (i32, i32) {
    %c0_i32 = arith.constant 0 : i32
    %c0_i32_0 = arith.constant 0 : i32
    return %arg0, %c0_i32 : i32, i32
  }
}

</mosaic_0001>

<llo_original>
// kernel: tpu_custom_call.1
$region0: #{tpu_custom_call.1}
  #allocation0 [shape = 'u32[]', space=smem, size = 0x4, offset = 0x4, fixed_abs, tag = 'smem constant byte address 0x4 - core index']
  #allocation1 [shape = 'u32[144,128]{1,0:T(1,128)}', space=vmem, size = 0x12000, scoped, tag = 'internal scratch']
  %s0 = inlined_call_operand.hbm [shape: f32[16,32], index: 0, kind: input, shape index: {}]
  %s1 = inlined_call_operand.hbm [shape: f32[32,128], index: 1, kind: input, shape index: {}]
  %s2 = inlined_call_operand.hbm [shape: f32[16,128], index: 2, kind: output, shape index: {}]
  %s3 = sld [smem:[#allocation0]]
  $region49: #{tpu_custom_call.1} parent=0
    _
  %s5 = ssub.s32 1, %s3
  %s6 = scalar_select 0, %s5, %s3
  $region1: #{tpu_custom_call.1} parent=0
    #allocation2 [shape = 'u8[8192]{0}', space=vmem, size = 0x2000, scoped, tag = 'input window, operand 0']
    #allocation3 [shape = 's32[2]{0}', space=sflag, size = 0x8, scoped, tag = 'scoped memory for tpu_custom_call.1']
    #allocation4 [shape = 's32[2]{0}', space=sflag, size = 0x8, scoped, tag = 'scoped memory for tpu_custom_call.1']
    #allocation5 [shape = 'u8[16384]{0}', space=vmem, size = 0x4000, scoped, tag = 'input window, operand 1, single buffered']
    #allocation6 [shape = 's32[1]{0}', space=sflag, size = 0x4, scoped, tag = 'scoped memory for tpu_custom_call.1']
    #allocation7 [shape = 'u8[8192]{0}', space=vmem, size = 0x2000, scoped, tag = 'output window, operand 0']
    %7 = vsyncpa [#allocation3], 0
    %s8 = scalar_lea.sflag [#allocation3], 1
    %9 = vsyncpa %s8, 0
    %10 = vsyncpa [#allocation6], 0
    %11 = vsyncpa [#allocation4], 0
    %s12 = scalar_lea.sflag [#allocation4], 1
    %13 = vsyncpa %s12, 0
    loop: start=0, step=1, limit=4
    $region2: #{tpu_custom_call.1} parent=1 // loop_pre_header
      _
    $region3: #{tpu_custom_call.1} parent=1 // loop_header
      %s15 = sphi 0, %s19
      %p16 = scmp.ge.s32.totalorder %s15, 4
      %s25 = sphi 0, %s27
      %s28 = sphi 0, %s25
      %s29 = sphi 0, %s28
      %s45 = sphi 0, %s29
      %s49 = sphi 0, %s49
      %s51 = sphi 0, %s49
      %s52 = sphi 0, %s51
      %s66 = sphi 0, %s52
      %s72 = sphi 0, %s74
      %s75 = sphi 0, %s72
      %s76 = sphi 0, %s75
      %s92 = sphi 0, %s76
    $region4: #{tpu_custom_call.1} parent=1 // loop_header_branch
      %18 = sbr.rel (%p16) target = $region8
    $region5: #{tpu_custom_call.1} parent=1 // loop_body
      %s20 = ssub.s32 %s15, 1
      %s21 = ssub.s32 %s15, 2
      %s22 = sadd.s32 %s15, 1
      %s23 = ssub.s32 %s15, %s22
      %p24 = scmp.eq.s32.totalorder %s23, 0
      %s26 = sadd.s32 %s25, 1
      %s27 = scalar_select %p24, %s25, %s26
      %p30 = pneg %p24
      %p31 = scmp.eq.s32.totalorder %s15, 1
      %p32 = por %p30, %p31
      %p33 = scmp.ne.s32.totalorder %s25, %s28
      %p34 = scmp.eq.s32.totalorder %s15, 0
      %p35 = por %p33, %p34
      %p36 = scmp.ne.s32.totalorder %s25, %s28
      %p37 = scmp.eq.s32.totalorder %s20, 1
      %p38 = por %p36, %p37
      %p39 = scmp.ne.s32.totalorder %s28, %s29
      %p40 = scmp.eq.s32.totalorder %s20, 0
      %p41 = por %p39, %p40
      %p42 = scmp.ne.s32.totalorder %s28, %s29
      %p43 = scmp.eq.s32.totalorder %s21, 1
      %p44 = por %p42, %p43
      %p46 = scmp.ne.s32.totalorder %s29, %s45
      %p47 = scmp.eq.s32.totalorder %s21, 0
      %p48 = por %p46, %p47
      %s50 = sadd.s32 %s49, 1
      %p53 = scmp.eq.s32.totalorder %s15, 1
      %p54 = scmp.ne.s32.totalorder %s49, %s51
      %p55 = scmp.eq.s32.totalorder %s15, 0
      %p56 = por %p54, %p55
      %p57 = scmp.ne.s32.totalorder %s49, %s51
      %p58 = scmp.eq.s32.totalorder %s20, 1
      %p59 = por %p57, %p58
      %p60 = scmp.ne.s32.totalorder %s51, %s52
      %p61 = scmp.eq.s32.totalorder %s20, 0
      %p62 = por %p60, %p61
      %p63 = scmp.ne.s32.totalorder %s51, %s52
      %p64 = scmp.eq.s32.totalorder %s21, 1
      %p65 = por %p63, %p64
      %p67 = scmp.ne.s32.totalorder %s52, %s66
      %p68 = scmp.eq.s32.totalorder %s21, 0
      %p69 = por %p67, %p68
      %s70 = ssub.s32 %s15, %s22
      %p71 = scmp.eq.s32.totalorder %s70, 0
      %s73 = sadd.s32 %s72, 1
      %s74 = scalar_select %p71, %s72, %s73
      %p77 = pneg %p71
      %p78 = scmp.eq.s32.totalorder %s15, 1
      %p79 = por %p77, %p78
      %p80 = scmp.ne.s32.totalorder %s72, %s75
      %p81 = scmp.eq.s32.totalorder %s15, 0
      %p82 = por %p80, %p81
      %p83 = scmp.ne.s32.totalorder %s72, %s75
      %p84 = scmp.eq.s32.totalorder %s20, 1
      %p85 = por %p83, %p84
      %p86 = scmp.ne.s32.totalorder %s75, %s76
      %p87 = scmp.eq.s32.totalorder %s20, 0
      %p88 = por %p86, %p87
      %p89 = scmp.ne.s32.totalorder %s75, %s76
      %p90 = scmp.eq.s32.totalorder %s21, 1
      %p91 = por %p89, %p90
      %p93 = scmp.ne.s32.totalorder %s76, %s92
      %p94 = scmp.eq.s32.totalorder %s21, 0
      %p95 = por %p93, %p94
      %p96 = scmp.le.s32.totalorder 1, %s15
      %p97 = scmp.lt.s32.totalorder %s15, 3
      %p98 = pnand %p96, %p97
      %p99 = pneg %p98
      // Predicated region
      $region9: #{tpu_custom_call.1} parent=5 // pred_check
        _
      $region10: #{tpu_custom_call.1} parent=5 // pred_check_branch
        %101 = sbr.rel (%p98) target = $region12
      $region11: #{tpu_custom_call.1} parent=5 // pred_region
        %s102 = ssub.s32 %s15, 1
        // Predicated region
        $region13: #{tpu_custom_call.1} parent=11 // pred_check
          %p103 = pneg %p62
        $region14: #{tpu_custom_call.1} parent=11 // pred_check_branch
          %105 = sbr.rel (%p103) target = $region16
        $region15: #{tpu_custom_call.1} parent=11 // pred_region
          %s107 = ssub.s32 512, 512
          %108 = vsyncadd [#allocation6], %s107
          %s109 = sshll.u32 [#allocation5], 4
          %s110 = int_to_ptr.vmem [resolvable:$true] %s109
          %115 = dma.hbm_to_vmem [thread:$0]  %s1, 512, %s110, [#allocation6], 128, 128, 8
        $region16: #{tpu_custom_call.1} parent=11 // pred_fallthru
          _
      $region12: #{tpu_custom_call.1} parent=5 // pred_fallthru
        _
      %p116 = scmp.lt.s32.totalorder %s15, 2
      // Predicated region
      $region17: #{tpu_custom_call.1} parent=5 // pred_check
        %p117 = pneg %p116
      $region18: #{tpu_custom_call.1} parent=5 // pred_check_branch
        %119 = sbr.rel (%p117) target = $region20
      $region19: #{tpu_custom_call.1} parent=5 // pred_region
        // Predicated region
        $region21: #{tpu_custom_call.1} parent=19 // pred_check
          %p120 = pneg %p35
        $region22: #{tpu_custom_call.1} parent=19 // pred_check_branch
          %122 = sbr.rel (%p120) target = $region24
        $region23: #{tpu_custom_call.1} parent=19 // pred_region
          %s123 = sand.u32 %s25, 1
          %s124 = scalar_lea.sflag [#allocation3], %s123
          %s125 = sand.u32 %s25, 1
          %s126 = smul.addr %s125, 8
          %s127 = scalar_lea.vmem [#allocation2], %s126
          %s129 = ssub.s32 128, 128
          %130 = vsyncadd %s124, %s129
          %s131 = smul.addr %s15, 128
          %s132 = scalar_lea.hbm %s0, %s131
          %s134 = sshll.u32 %s127, 4
          %s135 = int_to_ptr.vmem [resolvable:$true] %s134
          %137 = dma.hbm_to_vmem [thread:$0]  %s132, 128, %s135, %s124
        $region24: #{tpu_custom_call.1} parent=19 // pred_fallthru
          _
      $region20: #{tpu_custom_call.1} parent=5 // pred_fallthru
        _
      %p138 = scmp.le.s32.totalorder 1, %s15
      %p139 = scmp.lt.s32.totalorder %s15, 3
      %p140 = pnand %p138, %p139
      %p141 = pneg %p140
      // Predicated region
      $region25: #{tpu_custom_call.1} parent=5 // pred_check
        _
      $region26: #{tpu_custom_call.1} parent=5 // pred_check_branch
        %143 = sbr.rel (%p140) target = $region28
      $region27: #{tpu_custom_call.1} parent=5 // pred_region
        %s144 = ssub.s32 %s15, 1
        %s145 = sand.u32 %s28, 1
        %s146 = scalar_lea.sflag [#allocation3], %s145
        %s147 = sand.u32 %s28, 1
        %s148 = smul.addr %s147, 8
        %s149 = scalar_lea.vmem [#allocation2], %s148
        // Predicated region
        $region29: #{tpu_custom_call.1} parent=27 // pred_check
          %p150 = pneg %p41
        $region30: #{tpu_custom_call.1} parent=27 // pred_check_branch
          %152 = sbr.rel (%p150) target = $region32
        $region31: #{tpu_custom_call.1} parent=27 // pred_region
          %153 = dma.done %s146, 128
        $region32: #{tpu_custom_call.1} parent=27 // pred_fallthru
          _
        // Predicated region
        $region33: #{tpu_custom_call.1} parent=27 // pred_check
          %p154 = pneg %p62
        $region34: #{tpu_custom_call.1} parent=27 // pred_check_branch
          %156 = sbr.rel (%p154) target = $region36
        $region35: #{tpu_custom_call.1} parent=27 // pred_region
          %157 = dma.done [#allocation6], 512
        $region36: #{tpu_custom_call.1} parent=27 // pred_fallthru
          _
        %s158 = sand.u32 %s28, 1
        %s159 = scalar_lea.sflag [#allocation3], %s158
        %s160 = sand.u32 %s28, 1
        %s161 = smul.addr %s160, 8
        %s162 = scalar_lea.vmem [#allocation2], %s161
        %p163 = pneg %p41
        %p164 = pneg %p38
        %p165 = pneg %p62
        %p166 = pneg %p59
        %p167 = pneg %p88
        %p168 = pneg %p85
        %s169 = sand.u32 %s75, 1
        %s170 = scalar_lea.sflag [#allocation4], %s169
        %s171 = sand.u32 %s75, 1
        %s172 = smul.addr %s171, 8
        %s173 = scalar_lea.vmem [#allocation7], %s172
        %v174 = vld [vmem:[%s149] sm:$0xff]
        %v175 = vld [vmem:[#allocation5] sm:$0xff]
        %v176 = vld [vmem:[#allocation5 + $0x8] sm:$0xff]
        %v177 = vld [vmem:[#allocation5 + $0x10] sm:$0xff]
        %v178 = vld [vmem:[#allocation5 + $0x18] sm:$0xff]
        %vm179 = vcmask 261120
        %v181 = vsel %vm179, %v174, 0
        %183 = vmatprep.subr.mxu0 0.0
        %184 = vmatpush1.msra.mxu0 %v175
        %185 = vmatprep.subr.mxu0 0.0
        %186 = vmatpush1.msra.mxu0 %v176
        %187 = vmatprep.subr.mxu0 0.0
        %188 = vmatpush1.msra.mxu0 %v177
        %189 = vmatprep.subr.mxu0 0.0
        %190 = vmatpush1.msra.mxu0 %v178
        %191 = vmatprep.subr.mxu0 0.0
        %192 = vmatpush1.msra.mxu0 0.0
        %193 = vmatprep.subr.mxu0 0.0
        %194 = vmatpush1.msra.mxu0 0.0
        %195 = vmatprep.subr.mxu0 0.0
        %196 = vmatpush1.msra.mxu0 0.0
        %197 = vmatprep.subr.mxu0 0.0
        %198 = vmatpush1.msra.mxu0 0.0
        %199 = vmatprep.subr.mxu0 0.0
        %200 = vmatpush1.msra.mxu0 0.0
        %201 = vmatprep.subr.mxu0 0.0
        %202 = vmatpush1.msra.mxu0 0.0
        %203 = vmatprep.subr.mxu0 0.0
        %204 = vmatpush1.msra.mxu0 0.0
        %205 = vmatprep.subr.mxu0 0.0
        %206 = vmatpush1.msra.mxu0 0.0
        %207 = vmatprep.subr.mxu0 0.0
        %208 = vmatpush1.msra.mxu0 0.0
        %209 = vmatprep.subr.mxu0 0.0
        %210 = vmatpush1.msra.mxu0 0.0
        %211 = vmatprep.subr.mxu0 0.0
        %212 = vmatpush1.msra.mxu0 0.0
        %213 = vmatprep.subr.mxu0 0.0
        %214 = vmatpush1.msra.mxu0 0.0
        %215 = vmatprep.subr.mxu0 0.0
        %216 = vmatpush1.msra.mxu0 0.0
        %217 = vmatprep.subr.mxu0 0.0
        %218 = vmatpush1.msra.mxu0 0.0
        %219 = vmatprep.subr.mxu0 0.0
        %220 = vmatpush1.msra.mxu0 0.0
        %221 = vmatprep.subr.mxu0 0.0
        %222 = vmatpush1.msra.mxu0 0.0
        %223 = vmatprep.subr.mxu0 0.0
        %224 = vmatpush1.msra.mxu0 0.0
        %225 = vmatprep.subr.mxu0 0.0
        %226 = vmatpush1.msra.mxu0 0.0
        %227 = vmatprep.subr.mxu0 0.0
        %228 = vmatpush1.msra.mxu0 0.0
        %229 = vmatprep.subr.mxu0 0.0
        %230 = vmatpush1.msra.mxu0 0.0
        %231 = vmatprep.subr.mxu0 0.0
        %232 = vmatpush1.msra.mxu0 0.0
        %233 = vmatprep.subr.mxu0 0.0
        %234 = vmatpush1.msra.mxu0 0.0
        %235 = vmatprep.subr.mxu0 0.0
        %236 = vmatpush1.msra.mxu0 0.0
        %237 = vmatprep.subr.mxu0 0.0
        %238 = vmatpush1.msra.mxu0 0.0
        %239 = vmatprep.subr.mxu0 0.0
        %240 = vmatpush1.msra.mxu0 0.0
        %241 = vmatprep.subr.mxu0 0.0
        %242 = vmatpush1.msra.mxu0 0.0
        %243 = vmatprep.subr.mxu0 0.0
        %244 = vmatpush1.msra.mxu0 0.0
        %245 = vmatprep.subr.mxu0 0.0
        %246 = vmatpush1.msra.mxu0 0.0
        %247 = vmatprep.mubr.f32.mxu0 0.0
        %248 = vmatmul.mubr.f32.gmra.mrb[0].mxu0 %v181
        %v249 = vpop.f32.mrb[0].mxu0
        %v250 = vadd.f32 0.0, %v249
        %v251 = vpop.f32.mrb[0].mxu0
        %252 = vdwg.mxu0
        %253 = vst [vmem:[%s173] sm:$0xff] %v250
        %s254 = sand.u32 %s75, 1
        %s255 = scalar_lea.sflag [#allocation4], %s254
        %s256 = sand.u32 %s75, 1
        %s257 = smul.addr %s256, 8
        %s258 = scalar_lea.vmem [#allocation7], %s257
        // Predicated region
        $region37: #{tpu_custom_call.1} parent=27 // pred_check
          %p259 = pneg %p85
        $region38: #{tpu_custom_call.1} parent=27 // pred_check_branch
          %261 = sbr.rel (%p259) target = $region40
        $region39: #{tpu_custom_call.1} parent=27 // pred_region
          %s263 = ssub.s32 128, 128
          %264 = vsyncadd %s255, %s263
          %s265 = smul.addr %s20, 128
          %s266 = scalar_lea.hbm %s2, %s265
          %s268 = sshll.u32 %s258, 4
          %s269 = int_to_ptr.vmem [resolvable:$true] %s268
          %271 = dma.vmem_to_hbm [thread:$0]  %s269, 128, %s266, %s255
        $region40: #{tpu_custom_call.1} parent=27 // pred_fallthru
          _
      $region28: #{tpu_custom_call.1} parent=5 // pred_fallthru
        _
      %p272 = scmp.le.s32.totalorder 2, %s15
      // Predicated region
      $region41: #{tpu_custom_call.1} parent=5 // pred_check
        %p273 = pneg %p272
      $region42: #{tpu_custom_call.1} parent=5 // pred_check_branch
        %275 = sbr.rel (%p273) target = $region44
      $region43: #{tpu_custom_call.1} parent=5 // pred_region
        %s276 = ssub.s32 %s15, 2
        // Predicated region
        $region45: #{tpu_custom_call.1} parent=43 // pred_check
          %p277 = pneg %p91
        $region46: #{tpu_custom_call.1} parent=43 // pred_check_branch
          %279 = sbr.rel (%p277) target = $region48
        $region47: #{tpu_custom_call.1} parent=43 // pred_region
          %s280 = sand.u32 %s76, 1
          %s281 = scalar_lea.sflag [#allocation4], %s280
          %s282 = sand.u32 %s76, 1
          %s283 = smul.addr %s282, 8
          %s284 = scalar_lea.vmem [#allocation7], %s283
          %285 = dma.done %s281, 128
        $region48: #{tpu_custom_call.1} parent=43 // pred_fallthru
          _
      $region44: #{tpu_custom_call.1} parent=5 // pred_fallthru
        _
    $region6: #{tpu_custom_call.1} parent=1 // loop_footer
      %s19 = sadd.s32 1, %s15
    $region7: #{tpu_custom_call.1} parent=1 // loop_footer_branch
      %14 = sbr.rel target = $region3
    $region8: #{tpu_custom_call.1} parent=1 // loop_exit
      _
    %286 = vsyncpa [#allocation3], 1
    %s287 = scalar_lea.sflag [#allocation3], 1
    %288 = vsyncpa %s287, 1
    %289 = vsyncpa [#allocation6], 1
    %290 = vsyncpa [#allocation4], 1
    %s291 = scalar_lea.sflag [#allocation4], 1
    %292 = vsyncpa %s291, 1

</llo_original>
